<compile_context>
chip_gen: v6e
topology: v6e:2x2x1
jax: 0.10.0
libtpu: 0.0.40
codegen_flags: <defaults>
</compile_context>

<pallas_src>
import functools

import jax
import jax.numpy as jnp
from jax import lax
from jax.experimental import pallas as pl
from jax.experimental.pallas import tpu as pltpu

_GROUP = 128           # lanes per inner group = one vreg width
_I32_MIN = -2 ** 31


def _topk_kernel(x_ref, o_ref, *, k, mode):
    """x_ref: (block_rows, S) input dtype; o_ref: (k, block_rows) input dtype.

    mode: "f32"  - generic float path (int32 value keys, 2-reduce knockout)
          "bf16" - fused value+index int32 key (single reduce per step)
          "int"  - signed-integer path (keys are the widened values)
    """
    block_rows, s = x_ref.shape
    n_groups = block_rows // _GROUP
    fill = jnp.int32(_I32_MIN)

    # Hoisted out of the group loop (JAX does not CSE broadcast_in_dim):
    # sublane (sequence) index of every element of one group.
    row_ids = lax.broadcasted_iota(jnp.int32, (s, _GROUP), 0)

    def group_body(g, carry):
        start = pl.multiple_of(g * _GROUP, _GROUP)
        xg = x_ref[pl.ds(start, _GROUP), :]                      # (GROUP, S)

        # 32-bit working copy; rows -> lanes transpose runs on the idle XLU.
        if mode == "int":
            keys = jnp.transpose(xg.astype(jnp.int32))           # (S, GROUP)
        else:
            w = jnp.transpose(xg.astype(jnp.float32))            # (S, GROUP)
            bits = pltpu.bitcast(w, jnp.int32)
            # Monotone (order-preserving) int32 key of the float value.
            keys = jnp.where(bits < 0, bits ^ jnp.int32(0x7FFFFFFF), bits)
            if mode == "bf16":
                # bf16 value lives entirely in the top 16 key bits; pack the
                # sequence index into the low 16 bits -> unique keys, so one
                # sublane max + one equality knockout per selected element.
                keys = (keys & jnp.int32(-0x10000)) | row_ids

        outs = []
        for t in range(k):                                       # k small: unrolled
            m = jnp.max(keys, axis=0, keepdims=True)             # (1, GROUP)
            outs.append(m)
            if t + 1 < k:
                if mode == "bf16":
                    keys = jnp.where(keys == m, fill, keys)      # unique keys
                else:
                    # Knock out exactly ONE occurrence of the max so duplicated
                    # values are kept, like torch.topk.
                    cand = jnp.where(keys == m, row_ids, jnp.int32(s))
                    first = jnp.min(cand, axis=0, keepdims=True)
                    keys = jnp.where(row_ids == first, fill, keys)

        mk = jnp.concatenate(outs, axis=0)                       # (k, GROUP)
        if mode == "int":
            vals = mk
        elif mode == "bf16":
            hi = mk & jnp.int32(-0x10000)
            vbits = jnp.where(hi < 0, hi ^ jnp.int32(0x7FFF0000), hi)
            vals = pltpu.bitcast(vbits, jnp.float32)
        else:
            vbits = jnp.where(mk < 0, mk ^ jnp.int32(0x7FFFFFFF), mk)
            vals = pltpu.bitcast(vbits, jnp.float32)

        # Single lane-dense store of all k values for this group.
        o_ref[:, pl.ds(start, _GROUP)] = vals.astype(o_ref.dtype)
        return carry

    lax.fori_loop(0, n_groups, group_body, 0, unroll=min(2, n_groups))


def topk_pool(x, k=7):
    """x: [B, F, S] -> [B, F, k]: top-k values over the last axis, sorted descending."""
    B, Fd, S = x.shape
    if not 1 <= k <= S:
        raise ValueError("k must satisfy 1 <= k <= seq_len")
    if jnp.issubdtype(x.dtype, jnp.floating):
        mode = "bf16" if (x.dtype == jnp.bfloat16 and S <= 0x10000) else "f32"
    elif jnp.issubdtype(x.dtype, jnp.signedinteger) and x.dtype.itemsize <= 4:
        mode = "int"   # values-only output is exact even with INT_MIN fill
    else:
        # TODO(synk): unsigned / 64-bit dtypes would need a different key map.
        raise NotImplementedError(f"topk_pool: unsupported dtype {x.dtype}")
    # TODO(synk): very large S (>~16K) would need a chunked running-top-k merge
    # to keep the (S, 128) key intermediates inside the VMEM budget.

    rows = B * Fd
    xr = x.reshape(rows, S)                     # free: no data movement

    # ---- tiling ------------------------------------------------------------
    n_groups = pl.cdiv(rows, _GROUP)
    elem = x.dtype.itemsize
    # ~8 MiB input block per step: amortizes ~0.35us/step overhead; 2x in +
    # tiny out stays well under 48 MiB (safe on v7x's 64 MiB VMEM).
    gpb = max(1, min(n_groups, (8 * 1024 * 1024) // (_GROUP * S * elem)))
    if n_groups >= 8:
        # Keep >= 8 grid steps so both v7x TensorCores get >= 4 pipelined steps.
        gpb = min(gpb, max(1, n_groups // 8))
    n_blocks = pl.cdiv(n_groups, gpb)
    if n_blocks > 1 and n_blocks % 2 == 1 and gpb > 1:
        # Prefer an even grid length (balanced across 2 TensorCores on v7x).
        for g2 in range(gpb, max(1, gpb // 2) - 1, -1):
            if pl.cdiv(n_groups, g2) % 2 == 0:
                gpb = g2
                break
        n_blocks = pl.cdiv(n_groups, gpb)
    block_rows = gpb * _GROUP

    # Only a single-block (tiny) problem can need padding; multi-block grids
    # use the standard ragged last block (padded lanes' outputs are discarded).
    rows_in = rows
    if rows < block_rows:
        xr = jnp.pad(xr, ((0, block_rows - rows), (0, 0)))
        rows_in = block_rows

    out = pl.pallas_call(
        functools.partial(_topk_kernel, k=k, mode=mode),
        out_shape=jax.ShapeDtypeStruct((k, rows_in), x.dtype),
        grid_spec=pltpu.PrefetchScalarGridSpec(
            num_scalar_prefetch=0,
            grid=(n_blocks,),
            in_specs=[pl.BlockSpec((block_rows, S), lambda i: (i, 0))],
            out_specs=pl.BlockSpec((k, block_rows), lambda i: (0, i)),
        ),
        compiler_params=pltpu.CompilerParams(
            dimension_semantics=("parallel",),
            vmem_limit_bytes=48 * 1024 * 1024,
        ),
    )(xr)

    # Output is tiny (k << S): this transpose is ~k/S of the input traffic.
    return jnp.transpose(out[:, :rows]).reshape(B, Fd, k)


if __name__ == "__main__":
    K = 7

    # Primary small example consistent with the module: [batch, feature_dim, seq_len].
    x = jax.random.normal(jax.random.PRNGKey(0), (2, 4, 16), dtype=jnp.float32)
    z = jax.block_until_ready(topk_pool(x, k=K))
    ref, _ = jax.lax.top_k(x, K)
    assert z.shape == (2, 4, K), z.shape
    assert jnp.array_equal(z, ref), "f32 small-shape mismatch vs lax.top_k"

    # Odd seq_len and row count (ragged sublanes, padded lanes).
    x2 = jax.random.normal(jax.random.PRNGKey(1), (3, 5, 33), dtype=jnp.float32)
    z2 = jax.block_until_ready(topk_pool(x2, k=K))
    ref2, _ = jax.lax.top_k(x2, K)
    assert jnp.array_equal(z2, ref2), "f32 odd-shape mismatch vs lax.top_k"

    # Multi-block grid with a ragged last block (rows > 1024, S % 8 != 0).
    x3 = jax.random.normal(jax.random.PRNGKey(2), (6, 219, 33), dtype=jnp.float32)
    z3 = jax.block_until_ready(topk_pool(x3, k=K))
    ref3, _ = jax.lax.top_k(x3, K)
    assert jnp.array_equal(z3, ref3), "f32 multi-block mismatch vs lax.top_k"

    # bf16 exercises the fused value+index key path.
    x4 = jax.random.normal(jax.random.PRNGKey(3), (4, 9, 40), dtype=jnp.bfloat16)
    z4 = jax.block_until_ready(topk_pool(x4, k=K))
    ref4, _ = jax.lax.top_k(x4, K)
    assert jnp.array_equal(z4, ref4), "bf16 mismatch vs lax.top_k"

    print("KERNEL_OK")
</pallas_src>

<mosaic_0001>
module attributes {stable_mosaic.version = 11 : i64} {
  func.func @_topk_kernel(%arg0: i32, %arg1: memref<128x16xf32, #tpu.memory_space<vmem>>, %arg2: memref<7x128xf32, #tpu.memory_space<vmem>>) attributes {dimension_semantics = [#tpu.dimension_semantics<parallel>], iteration_bounds = array<i64: 1>, scalar_prefetch = 0 : i64, scratch_operands = 0 : i64, tpu.core_type = #tpu.core_type<tc>, window_params = [{transform_indices = @transform_0, window_bounds = array<i64: 128, 16>}, {transform_indices = @transform_1, window_bounds = array<i64: 7, 128>}]} {
    %0 = tpu.iota {dimensions = array<i32: 0>} : vector<16x128xi32>
    %c-2147483648_i32 = arith.constant -2147483648 : i32
    %c0_i32 = arith.constant 0 : i32
    %c128_i32 = arith.constant 128 : i32
    %1 = arith.muli %c0_i32, %c128_i32 : i32
    %2 = tpu.assume_multiple %1, 128 : i32
    %3 = arith.index_cast %2 : i32 to index
    %c0 = arith.constant 0 : index
    %4 = vector.load %arg1[%3, %c0] : memref<128x16xf32, #tpu.memory_space<vmem>>, vector<128x16xf32>
    %5 = tpu.transpose %4, [1, 0] : vector<128x16xf32> -> vector<16x128xf32>
    %6 = tpu.bitcast %5 : vector<16x128xf32> -> vector<16x128xi32>
    %c0_i32_0 = arith.constant 0 : i32
    %7 = vector.broadcast %c0_i32_0 : i32 to vector<16x128xi32>
    %8 = arith.cmpi slt, %6, %7 : vector<16x128xi32>
    %c2147483647_i32 = arith.constant 2147483647 : i32
    %9 = vector.broadcast %c2147483647_i32 : i32 to vector<16x128xi32>
    %10 = arith.xori %6, %9 : vector<16x128xi32>
    %11 = arith.select %8, %10, %6 : vector<16x128xi1>, vector<16x128xi32>
    %cst = arith.constant dense<-2147483648> : vector<128xi32>
    %12 = vector.multi_reduction <maxsi>, %11, %cst [0] : vector<16x128xi32> to vector<128xi32>
    %13 = vector.shape_cast %12 : vector<128xi32> to vector<1x128xi32>
    %14 = vector.broadcast %13 : vector<1x128xi32> to vector<16x128xi32>
    %15 = arith.cmpi eq, %11, %14 : vector<16x128xi32>
    %c16_i32 = arith.constant 16 : i32
    %16 = vector.broadcast %c16_i32 : i32 to vector<16x128xi32>
    %17 = arith.select %15, %0, %16 : vector<16x128xi1>, vector<16x128xi32>
    %cst_1 = arith.constant dense<2147483647> : vector<128xi32>
    %18 = vector.multi_reduction <minsi>, %17, %cst_1 [0] : vector<16x128xi32> to vector<128xi32>
    %19 = vector.shape_cast %18 : vector<128xi32> to vector<1x128xi32>
    %20 = vector.broadcast %19 : vector<1x128xi32> to vector<16x128xi32>
    %21 = arith.cmpi eq, %0, %20 : vector<16x128xi32>
    %22 = vector.broadcast %c-2147483648_i32 : i32 to vector<16x128xi32>
    %23 = arith.select %21, %22, %11 : vector<16x128xi1>, vector<16x128xi32>
    %cst_2 = arith.constant dense<-2147483648> : vector<128xi32>
    %24 = vector.multi_reduction <maxsi>, %23, %cst_2 [0] : vector<16x128xi32> to vector<128xi32>
    %25 = vector.shape_cast %24 : vector<128xi32> to vector<1x128xi32>
    %26 = vector.broadcast %25 : vector<1x128xi32> to vector<16x128xi32>
    %27 = arith.cmpi eq, %23, %26 : vector<16x128xi32>
    %c16_i32_3 = arith.constant 16 : i32
    %28 = vector.broadcast %c16_i32_3 : i32 to vector<16x128xi32>
    %29 = arith.select %27, %0, %28 : vector<16x128xi1>, vector<16x128xi32>
    %cst_4 = arith.constant dense<2147483647> : vector<128xi32>
    %30 = vector.multi_reduction <minsi>, %29, %cst_4 [0] : vector<16x128xi32> to vector<128xi32>
    %31 = vector.shape_cast %30 : vector<128xi32> to vector<1x128xi32>
    %32 = vector.broadcast %31 : vector<1x128xi32> to vector<16x128xi32>
    %33 = arith.cmpi eq, %0, %32 : vector<16x128xi32>
    %34 = vector.broadcast %c-2147483648_i32 : i32 to vector<16x128xi32>
    %35 = arith.select %33, %34, %23 : vector<16x128xi1>, vector<16x128xi32>
    %cst_5 = arith.constant dense<-2147483648> : vector<128xi32>
    %36 = vector.multi_reduction <maxsi>, %35, %cst_5 [0] : vector<16x128xi32> to vector<128xi32>
    %37 = vector.shape_cast %36 : vector<128xi32> to vector<1x128xi32>
    %38 = vector.broadcast %37 : vector<1x128xi32> to vector<16x128xi32>
    %39 = arith.cmpi eq, %35, %38 : vector<16x128xi32>
    %c16_i32_6 = arith.constant 16 : i32
    %40 = vector.broadcast %c16_i32_6 : i32 to vector<16x128xi32>
    %41 = arith.select %39, %0, %40 : vector<16x128xi1>, vector<16x128xi32>
    %cst_7 = arith.constant dense<2147483647> : vector<128xi32>
    %42 = vector.multi_reduction <minsi>, %41, %cst_7 [0] : vector<16x128xi32> to vector<128xi32>
    %43 = vector.shape_cast %42 : vector<128xi32> to vector<1x128xi32>
    %44 = vector.broadcast %43 : vector<1x128xi32> to vector<16x128xi32>
    %45 = arith.cmpi eq, %0, %44 : vector<16x128xi32>
    %46 = vector.broadcast %c-2147483648_i32 : i32 to vector<16x128xi32>
    %47 = arith.select %45, %46, %35 : vector<16x128xi1>, vector<16x128xi32>
    %cst_8 = arith.constant dense<-2147483648> : vector<128xi32>
    %48 = vector.multi_reduction <maxsi>, %47, %cst_8 [0] : vector<16x128xi32> to vector<128xi32>
    %49 = vector.shape_cast %48 : vector<128xi32> to vector<1x128xi32>
    %50 = vector.broadcast %49 : vector<1x128xi32> to vector<16x128xi32>
    %51 = arith.cmpi eq, %47, %50 : vector<16x128xi32>
    %c16_i32_9 = arith.constant 16 : i32
    %52 = vector.broadcast %c16_i32_9 : i32 to vector<16x128xi32>
    %53 = arith.select %51, %0, %52 : vector<16x128xi1>, vector<16x128xi32>
    %cst_10 = arith.constant dense<2147483647> : vector<128xi32>
    %54 = vector.multi_reduction <minsi>, %53, %cst_10 [0] : vector<16x128xi32> to vector<128xi32>
    %55 = vector.shape_cast %54 : vector<128xi32> to vector<1x128xi32>
    %56 = vector.broadcast %55 : vector<1x128xi32> to vector<16x128xi32>
    %57 = arith.cmpi eq, %0, %56 : vector<16x128xi32>
    %58 = vector.broadcast %c-2147483648_i32 : i32 to vector<16x128xi32>
    %59 = arith.select %57, %58, %47 : vector<16x128xi1>, vector<16x128xi32>
    %cst_11 = arith.constant dense<-2147483648> : vector<128xi32>
    %60 = vector.multi_reduction <maxsi>, %59, %cst_11 [0] : vector<16x128xi32> to vector<128xi32>
    %61 = vector.shape_cast %60 : vector<128xi32> to vector<1x128xi32>
    %62 = vector.broadcast %61 : vector<1x128xi32> to vector<16x128xi32>
    %63 = arith.cmpi eq, %59, %62 : vector<16x128xi32>
    %c16_i32_12 = arith.constant 16 : i32
    %64 = vector.broadcast %c16_i32_12 : i32 to vector<16x128xi32>
    %65 = arith.select %63, %0, %64 : vector<16x128xi1>, vector<16x128xi32>
    %cst_13 = arith.constant dense<2147483647> : vector<128xi32>
    %66 = vector.multi_reduction <minsi>, %65, %cst_13 [0] : vector<16x128xi32> to vector<128xi32>
    %67 = vector.shape_cast %66 : vector<128xi32> to vector<1x128xi32>
    %68 = vector.broadcast %67 : vector<1x128xi32> to vector<16x128xi32>
    %69 = arith.cmpi eq, %0, %68 : vector<16x128xi32>
    %70 = vector.broadcast %c-2147483648_i32 : i32 to vector<16x128xi32>
    %71 = arith.select %69, %70, %59 : vector<16x128xi1>, vector<16x128xi32>
    %cst_14 = arith.constant dense<-2147483648> : vector<128xi32>
    %72 = vector.multi_reduction <maxsi>, %71, %cst_14 [0] : vector<16x128xi32> to vector<128xi32>
    %73 = vector.shape_cast %72 : vector<128xi32> to vector<1x128xi32>
    %74 = vector.broadcast %73 : vector<1x128xi32> to vector<16x128xi32>
    %75 = arith.cmpi eq, %71, %74 : vector<16x128xi32>
    %c16_i32_15 = arith.constant 16 : i32
    %76 = vector.broadcast %c16_i32_15 : i32 to vector<16x128xi32>
    %77 = arith.select %75, %0, %76 : vector<16x128xi1>, vector<16x128xi32>
    %cst_16 = arith.constant dense<2147483647> : vector<128xi32>
    %78 = vector.multi_reduction <minsi>, %77, %cst_16 [0] : vector<16x128xi32> to vector<128xi32>
    %79 = vector.shape_cast %78 : vector<128xi32> to vector<1x128xi32>
    %80 = vector.broadcast %79 : vector<1x128xi32> to vector<16x128xi32>
    %81 = arith.cmpi eq, %0, %80 : vector<16x128xi32>
    %82 = vector.broadcast %c-2147483648_i32 : i32 to vector<16x128xi32>
    %83 = arith.select %81, %82, %71 : vector<16x128xi1>, vector<16x128xi32>
    %cst_17 = arith.constant dense<-2147483648> : vector<128xi32>
    %84 = vector.multi_reduction <maxsi>, %83, %cst_17 [0] : vector<16x128xi32> to vector<128xi32>
    %85 = vector.shape_cast %84 : vector<128xi32> to vector<1x128xi32>
    %86 = tpu.concatenate %13, %25, %37, %49, %61, %73, %85 in 0 : vector<1x128xi32>, vector<1x128xi32>, vector<1x128xi32>, vector<1x128xi32>, vector<1x128xi32>, vector<1x128xi32>, vector<1x128xi32> -> vector<7x128xi32>
    %c0_i32_18 = arith.constant 0 : i32
    %87 = vector.broadcast %c0_i32_18 : i32 to vector<7x128xi32>
    %88 = arith.cmpi slt, %86, %87 : vector<7x128xi32>
    %c2147483647_i32_19 = arith.constant 2147483647 : i32
    %89 = vector.broadcast %c2147483647_i32_19 : i32 to vector<7x128xi32>
    %90 = arith.xori %86, %89 : vector<7x128xi32>
    %91 = arith.select %88, %90, %86 : vector<7x128xi1>, vector<7x128xi32>
    %92 = tpu.bitcast %91 : vector<7x128xi32> -> vector<7x128xf32>
    %c0_20 = arith.constant 0 : index
    %93 = arith.index_cast %2 : i32 to index
    %94 = vector.load %arg2[%c0_20, %93] : memref<7x128xf32, #tpu.memory_space<vmem>>, vector<7x128xf32>
    tpu.vector_store %arg2[%c0_20, %93], %92 {strides = array<i32>} : memref<7x128xf32, #tpu.memory_space<vmem>>, vector<7x128xf32>,
    %c1_i32 = arith.constant 1 : i32
    return
  }
  func.func @transform_0(%arg0: i32) -> (i32, i32) {
    %c0_i32 = arith.constant 0 : i32
    %c0_i32_0 = arith.constant 0 : i32
    return %arg0, %c0_i32 : i32, i32
  }
  func.func @transform_1(%arg0: i32) -> (i32, i32) {
    %c0_i32 = arith.constant 0 : i32
    %c0_i32_0 = arith.constant 0 : i32
    return %c0_i32, %arg0 : i32, i32
  }
}

</mosaic_0001>

<llo_original>
// kernel: tpu_custom_call.1
$region0: #{tpu_custom_call.1}
  #allocation0 [shape = 'u32[]', space=smem, size = 0x4, offset = 0x4, fixed_abs, tag = 'smem constant byte address 0x4 - core index']
  #allocation1 [shape = 'u32[144,128]{1,0:T(1,128)}', space=vmem, size = 0x12000, scoped, tag = 'internal scratch']
  %s0 = inlined_call_operand.vmem [shape: f32[128,16], index: 0, kind: input, shape index: {}]
  %s1 = inlined_call_operand.hbm [shape: f32[7,128], index: 1, kind: output, shape index: {}]
  %s2 = sld [smem:[#allocation0]]
  $region14: #{tpu_custom_call.1} parent=0
    _
  %s4 = ssub.s32 1, %s2
  %s5 = scalar_select 0, %s4, %s2
  $region1: #{tpu_custom_call.1} parent=0
    #allocation2 [shape = 'u8[4096]{0}', space=vmem, size = 0x1000, scoped, tag = 'output window, operand 0, single buffered']
    #allocation3 [shape = 's32[1]{0}', space=sflag, size = 0x4, scoped, tag = 'scoped memory for tpu_custom_call.1']
    %6 = vsyncpa [#allocation3], 0
    // Predicated region
    $region2: #{tpu_custom_call.1} parent=1 // pred_check
      _
    $region3: #{tpu_custom_call.1} parent=1 // pred_check_branch
      %8 = sbr.rel (0) target = $region5
    $region4: #{tpu_custom_call.1} parent=1 // pred_region
      _
    $region5: #{tpu_custom_call.1} parent=1 // pred_fallthru
      _
    %v9 = vlaneseq
    %v10 = vshrl.u32 %v9, 7
    %v11 = vadd.s32 %v10, 8
    %v12 = vld [vmem:[%s0] sm:$0xff]
    %v13 = vld [vmem:[%s0 + $0x8] sm:$0xff]
    %v14 = vld [vmem:[%s0 + $0x10] sm:$0xff]
    %v15 = vld [vmem:[%s0 + $0x18] sm:$0xff]
    %v16 = vld [vmem:[%s0 + $0x20] sm:$0xff]
    %v17 = vld [vmem:[%s0 + $0x28] sm:$0xff]
    %v18 = vld [vmem:[%s0 + $0x30] sm:$0xff]
    %v19 = vld [vmem:[%s0 + $0x38] sm:$0xff]
    %v20 = vld [vmem:[%s0 + $0x40] sm:$0xff]
    %v21 = vld [vmem:[%s0 + $0x48] sm:$0xff]
    %v22 = vld [vmem:[%s0 + $0x50] sm:$0xff]
    %v23 = vld [vmem:[%s0 + $0x58] sm:$0xff]
    %v24 = vld [vmem:[%s0 + $0x60] sm:$0xff]
    %v25 = vld [vmem:[%s0 + $0x68] sm:$0xff]
    %v26 = vld [vmem:[%s0 + $0x70] sm:$0xff]
    %v27 = vld [vmem:[%s0 + $0x78] sm:$0xff]
    %28 = vxpose.xlu0.b32.start [1/16] %v12, 128
    %29 = vxpose.xlu0.b32.cont [2/16] %v13, 128
    %30 = vxpose.xlu0.b32.cont [3/16] %v14, 128
    %31 = vxpose.xlu0.b32.cont [4/16] %v15, 128
    %32 = vxpose.xlu0.b32.cont [5/16] %v16, 128
    %33 = vxpose.xlu0.b32.cont [6/16] %v17, 128
    %34 = vxpose.xlu0.b32.cont [7/16] %v18, 128
    %35 = vxpose.xlu0.b32.cont [8/16] %v19, 128
    %36 = vxpose.xlu0.b32.cont [9/16] %v20, 128
    %37 = vxpose.xlu0.b32.cont [10/16] %v21, 128
    %38 = vxpose.xlu0.b32.cont [11/16] %v22, 128
    %39 = vxpose.xlu0.b32.cont [12/16] %v23, 128
    %40 = vxpose.xlu0.b32.cont [13/16] %v24, 128
    %41 = vxpose.xlu0.b32.cont [14/16] %v25, 128
    %42 = vxpose.xlu0.b32.cont [15/16] %v26, 128
    %43 = vxpose.xlu0.b32.end [16/16] %v27, 128
    %v44 = vpop.trf.xlu0
    %v45 = vpop.trf.xlu0
    %v46 = vpop.trf.xlu0
    %v47 = vpop.trf.xlu0
    %v48 = vpop.trf.xlu0
    %v49 = vpop.trf.xlu0
    %v50 = vpop.trf.xlu0
    %v51 = vpop.trf.xlu0
    %v52 = vpop.trf.xlu0
    %v53 = vpop.trf.xlu0
    %v54 = vpop.trf.xlu0
    %v55 = vpop.trf.xlu0
    %v56 = vpop.trf.xlu0
    %v57 = vpop.trf.xlu0
    %v58 = vpop.trf.xlu0
    %v59 = vpop.trf.xlu0
    %vm62 = vcmp.lt.s32.totalorder %v44, 0
    %vm63 = vcmp.lt.s32.totalorder %v45, 0
    %v64 = vxor.u32 %v44, 2147483647
    %v65 = vxor.u32 %v45, 2147483647
    %v66 = vsel %vm62, %v64, %v44
    %v67 = vsel %vm63, %v65, %v45
    %vm68 = vcmp.gt.s32.totalorder %v66, %v67
    %v69 = vsel %vm68, %v66, %v67
    %v70 = vrot.slane %v69, 4
    %vm71 = vcmp.gt.s32.totalorder %v69, %v70
    %v72 = vsel %vm71, %v69, %v70
    %v73 = vrot.slane %v72, 2
    %vm74 = vcmp.gt.s32.totalorder %v72, %v73
    %v75 = vsel %vm74, %v72, %v73
    %v76 = vrot.slane %v75, 1
    %vm77 = vcmp.gt.s32.totalorder %v75, %v76
    %v78 = vsel %vm77, %v75, %v76
    %vm79 = vcmp.eq.s32.totalorder %v66, %v78
    %vm80 = vcmp.eq.s32.totalorder %v67, %v78
    %v81 = vsel %vm79, %v10, 16
    %v82 = vsel %vm80, %v11, 16
    %vm83 = vcmp.lt.s32.totalorder %v81, %v82
    %v84 = vsel %vm83, %v81, %v82
    %v85 = vrot.slane %v84, 4
    %vm86 = vcmp.lt.s32.totalorder %v84, %v85
    %v87 = vsel %vm86, %v84, %v85
    %v88 = vrot.slane %v87, 2
    %vm89 = vcmp.lt.s32.totalorder %v87, %v88
    %v90 = vsel %vm89, %v87, %v88
    %v91 = vrot.slane %v90, 1
    %vm92 = vcmp.lt.s32.totalorder %v90, %v91
    %v93 = vsel %vm92, %v90, %v91
    %vm94 = vcmp.eq.s32.totalorder %v10, %v93
    %vm95 = vcmp.eq.s32.totalorder %v11, %v93
    %v96 = vsel %vm94, 2147483648, %v66
    %v97 = vsel %vm95, 2147483648, %v67
    %vm98 = vcmp.gt.s32.totalorder %v96, %v97
    %v99 = vsel %vm98, %v96, %v97
    %v100 = vrot.slane %v99, 4
    %vm101 = vcmp.gt.s32.totalorder %v99, %v100
    %v102 = vsel %vm101, %v99, %v100
    %v103 = vrot.slane %v102, 2
    %vm104 = vcmp.gt.s32.totalorder %v102, %v103
    %v105 = vsel %vm104, %v102, %v103
    %v106 = vrot.slane %v105, 1
    %vm107 = vcmp.gt.s32.totalorder %v105, %v106
    %v108 = vsel %vm107, %v105, %v106
    %vm109 = vcmp.eq.s32.totalorder %v96, %v108
    %vm110 = vcmp.eq.s32.totalorder %v97, %v108
    %v111 = vsel %vm109, %v10, 16
    %v112 = vsel %vm110, %v11, 16
    %vm113 = vcmp.lt.s32.totalorder %v111, %v112
    %v114 = vsel %vm113, %v111, %v112
    %v115 = vrot.slane %v114, 4
    %vm116 = vcmp.lt.s32.totalorder %v114, %v115
    %v117 = vsel %vm116, %v114, %v115
    %v118 = vrot.slane %v117, 2
    %vm119 = vcmp.lt.s32.totalorder %v117, %v118
    %v120 = vsel %vm119, %v117, %v118
    %v121 = vrot.slane %v120, 1
    %vm122 = vcmp.lt.s32.totalorder %v120, %v121
    %v123 = vsel %vm122, %v120, %v121
    %vm124 = vcmp.eq.s32.totalorder %v10, %v123
    %vm125 = vcmp.eq.s32.totalorder %v11, %v123
    %v126 = vsel %vm124, 2147483648, %v96
    %v127 = vsel %vm125, 2147483648, %v97
    %vm128 = vcmp.gt.s32.totalorder %v126, %v127
    %v129 = vsel %vm128, %v126, %v127
    %v130 = vrot.slane %v129, 4
    %vm131 = vcmp.gt.s32.totalorder %v129, %v130
    %v132 = vsel %vm131, %v129, %v130
    %v133 = vrot.slane %v132, 2
    %vm134 = vcmp.gt.s32.totalorder %v132, %v133
    %v135 = vsel %vm134, %v132, %v133
    %v136 = vrot.slane %v135, 1
    %vm137 = vcmp.gt.s32.totalorder %v135, %v136
    %v138 = vsel %vm137, %v135, %v136
    %vm139 = vcmp.eq.s32.totalorder %v126, %v138
    %vm140 = vcmp.eq.s32.totalorder %v127, %v138
    %v141 = vsel %vm139, %v10, 16
    %v142 = vsel %vm140, %v11, 16
    %vm143 = vcmp.lt.s32.totalorder %v141, %v142
    %v144 = vsel %vm143, %v141, %v142
    %v145 = vrot.slane %v144, 4
    %vm146 = vcmp.lt.s32.totalorder %v144, %v145
    %v147 = vsel %vm146, %v144, %v145
    %v148 = vrot.slane %v147, 2
    %vm149 = vcmp.lt.s32.totalorder %v147, %v148
    %v150 = vsel %vm149, %v147, %v148
    %v151 = vrot.slane %v150, 1
    %vm152 = vcmp.lt.s32.totalorder %v150, %v151
    %v153 = vsel %vm152, %v150, %v151
    %vm154 = vcmp.eq.s32.totalorder %v10, %v153
    %vm155 = vcmp.eq.s32.totalorder %v11, %v153
    %v156 = vsel %vm154, 2147483648, %v126
    %v157 = vsel %vm155, 2147483648, %v127
    %vm158 = vcmp.gt.s32.totalorder %v156, %v157
    %v159 = vsel %vm158, %v156, %v157
    %v160 = vrot.slane %v159, 4
    %vm161 = vcmp.gt.s32.totalorder %v159, %v160
    %v162 = vsel %vm161, %v159, %v160
    %v163 = vrot.slane %v162, 2
    %vm164 = vcmp.gt.s32.totalorder %v162, %v163
    %v165 = vsel %vm164, %v162, %v163
    %v166 = vrot.slane %v165, 1
    %vm167 = vcmp.gt.s32.totalorder %v165, %v166
    %v168 = vsel %vm167, %v165, %v166
    %vm169 = vcmp.eq.s32.totalorder %v156, %v168
    %vm170 = vcmp.eq.s32.totalorder %v157, %v168
    %v171 = vsel %vm169, %v10, 16
    %v172 = vsel %vm170, %v11, 16
    %vm173 = vcmp.lt.s32.totalorder %v171, %v172
    %v174 = vsel %vm173, %v171, %v172
    %v175 = vrot.slane %v174, 4
    %vm176 = vcmp.lt.s32.totalorder %v174, %v175
    %v177 = vsel %vm176, %v174, %v175
    %v178 = vrot.slane %v177, 2
    %vm179 = vcmp.lt.s32.totalorder %v177, %v178
    %v180 = vsel %vm179, %v177, %v178
    %v181 = vrot.slane %v180, 1
    %vm182 = vcmp.lt.s32.totalorder %v180, %v181
    %v183 = vsel %vm182, %v180, %v181
    %vm184 = vcmp.eq.s32.totalorder %v10, %v183
    %vm185 = vcmp.eq.s32.totalorder %v11, %v183
    %v186 = vsel %vm184, 2147483648, %v156
    %v187 = vsel %vm185, 2147483648, %v157
    %vm188 = vcmp.gt.s32.totalorder %v186, %v187
    %v189 = vsel %vm188, %v186, %v187
    %v190 = vrot.slane %v189, 4
    %vm191 = vcmp.gt.s32.totalorder %v189, %v190
    %v192 = vsel %vm191, %v189, %v190
    %v193 = vrot.slane %v192, 2
    %vm194 = vcmp.gt.s32.totalorder %v192, %v193
    %v195 = vsel %vm194, %v192, %v193
    %v196 = vrot.slane %v195, 1
    %vm197 = vcmp.gt.s32.totalorder %v195, %v196
    %v198 = vsel %vm197, %v195, %v196
    %vm199 = vcmp.eq.s32.totalorder %v186, %v198
    %vm200 = vcmp.eq.s32.totalorder %v187, %v198
    %v201 = vsel %vm199, %v10, 16
    %v202 = vsel %vm200, %v11, 16
    %vm203 = vcmp.lt.s32.totalorder %v201, %v202
    %v204 = vsel %vm203, %v201, %v202
    %v205 = vrot.slane %v204, 4
    %vm206 = vcmp.lt.s32.totalorder %v204, %v205
    %v207 = vsel %vm206, %v204, %v205
    %v208 = vrot.slane %v207, 2
    %vm209 = vcmp.lt.s32.totalorder %v207, %v208
    %v210 = vsel %vm209, %v207, %v208
    %v211 = vrot.slane %v210, 1
    %vm212 = vcmp.lt.s32.totalorder %v210, %v211
    %v213 = vsel %vm212, %v210, %v211
    %vm214 = vcmp.eq.s32.totalorder %v10, %v213
    %vm215 = vcmp.eq.s32.totalorder %v11, %v213
    %v216 = vsel %vm214, 2147483648, %v186
    %v217 = vsel %vm215, 2147483648, %v187
    %vm218 = vcmp.gt.s32.totalorder %v216, %v217
    %v219 = vsel %vm218, %v216, %v217
    %v220 = vrot.slane %v219, 4
    %vm221 = vcmp.gt.s32.totalorder %v219, %v220
    %v222 = vsel %vm221, %v219, %v220
    %v223 = vrot.slane %v222, 2
    %vm224 = vcmp.gt.s32.totalorder %v222, %v223
    %v225 = vsel %vm224, %v222, %v223
    %v226 = vrot.slane %v225, 1
    %vm227 = vcmp.gt.s32.totalorder %v225, %v226
    %v228 = vsel %vm227, %v225, %v226
    %vm229 = vcmp.eq.s32.totalorder %v216, %v228
    %vm230 = vcmp.eq.s32.totalorder %v217, %v228
    %v231 = vsel %vm229, %v10, 16
    %v232 = vsel %vm230, %v11, 16
    %vm233 = vcmp.lt.s32.totalorder %v231, %v232
    %v234 = vsel %vm233, %v231, %v232
    %v235 = vrot.slane %v234, 4
    %vm236 = vcmp.lt.s32.totalorder %v234, %v235
    %v237 = vsel %vm236, %v234, %v235
    %v238 = vrot.slane %v237, 2
    %vm239 = vcmp.lt.s32.totalorder %v237, %v238
    %v240 = vsel %vm239, %v237, %v238
    %v241 = vrot.slane %v240, 1
    %vm242 = vcmp.lt.s32.totalorder %v240, %v241
    %v243 = vsel %vm242, %v240, %v241
    %vm244 = vcmp.eq.s32.totalorder %v10, %v243
    %vm245 = vcmp.eq.s32.totalorder %v11, %v243
    %v246 = vsel %vm244, 2147483648, %v216
    %v247 = vsel %vm245, 2147483648, %v217
    %vm248 = vcmp.gt.s32.totalorder %v246, %v247
    %v249 = vsel %vm248, %v246, %v247
    %v250 = vrot.slane %v249, 4
    %vm251 = vcmp.gt.s32.totalorder %v249, %v250
    %v252 = vsel %vm251, %v249, %v250
    %v253 = vrot.slane %v252, 2
    %vm254 = vcmp.gt.s32.totalorder %v252, %v253
    %v255 = vsel %vm254, %v252, %v253
    %v256 = vrot.slane %v255, 1
    %vm257 = vcmp.gt.s32.totalorder %v255, %v256
    %v258 = vsel %vm257, %v255, %v256
    %vm259 = vcmask 1040384
    %v260 = vsel %vm259, %v78, %v108
    %vm261 = vcmask 1041408
    %v262 = vsel %vm261, %v260, %v138
    %vm263 = vcmask 1042432
    %v264 = vsel %vm263, %v262, %v168
    %vm265 = vcmask 1043456
    %v266 = vsel %vm265, %v264, %v198
    %vm267 = vcmask 1044480
    %v268 = vsel %vm267, %v266, %v228
    %vm269 = vcmask 1045504
    %v270 = vsel %vm269, %v268, %v258
    %vm271 = vcmp.lt.s32.totalorder %v270, 0
    %v272 = vxor.u32 %v270, 2147483647
    %v273 = vsel %vm271, %v272, %v270
    %275 = vst [vmem:[#allocation2] sm:$0x7f] %v273
    // Predicated region
    $region6: #{tpu_custom_call.1} parent=1 // pred_check
      _
    $region7: #{tpu_custom_call.1} parent=1 // pred_check_branch
      %277 = sbr.rel (0) target = $region9
    $region8: #{tpu_custom_call.1} parent=1 // pred_region
      %s279 = ssub.s32 128, 128
      %280 = vsyncadd [#allocation3], %s279
      %s282 = sshll.u32 [#allocation2], 4
      %s283 = int_to_ptr.vmem [resolvable:$true] %s282
      %285 = dma.vmem_to_hbm [thread:$0]  %s283, 128, %s1, [#allocation3]
    $region9: #{tpu_custom_call.1} parent=1 // pred_fallthru
      _
    // Predicated region
    $region10: #{tpu_custom_call.1} parent=1 // pred_check
      _
    $region11: #{tpu_custom_call.1} parent=1 // pred_check_branch
      %287 = sbr.rel (0) target = $region13
    $region12: #{tpu_custom_call.1} parent=1 // pred_region
      %288 = dma.done [#allocation3], 128
    $region13: #{tpu_custom_call.1} parent=1 // pred_fallthru
      _
    %289 = vsyncpa [#allocation3], 1

</llo_original>
